<compile_context>
chip_gen: v6e
topology: v6e:2x2x1
jax: 0.10.0
libtpu: 0.0.40
codegen_flags: <defaults>
</compile_context>

<pallas_src>
import functools
import math

import jax
import jax.numpy as jnp
from jax import lax
from jax.experimental import pallas as pl
from jax.experimental.pallas import tpu as pltpu


_NEG_PAD = -1.0e9    # finite additive mask for padded key positions (HF style)
_M_FLOOR = -1.0e30   # floor for the running max: avoids (-inf) - (-inf) = NaN


# ---------------------------------------------------------------------------
# helpers
# ---------------------------------------------------------------------------
def _round_up(x, m):
    return (x + m - 1) // m * m


def _pick_divisor_tile(dim, target, align):
    """Largest `align`-multiple tile <= target dividing `dim`, else `dim`.
    Only used for model dims (hidden size) which are multiples of 128 in
    practice; the ragged dims (batch*seq) are padded instead."""
    if dim <= target:
        return dim
    t = (target // align) * align
    while t >= align:
        if dim % t == 0:
            return t
        t -= align
    return dim


def _vmem_limit_bytes():
    """Generation-aware scoped-VMEM limit."""
    try:
        kind = jax.devices()[0].device_kind.lower()
    except Exception:  # pragma: no cover
        kind = ""
    if ("v4" in kind) or ("v5" in kind) or ("v6" in kind):
        return 96 * 1024 * 1024   # 128 MiB physical on v4/v5e/v6e
    if "v7" in kind:
        return 48 * 1024 * 1024   # 64 MiB physical per TensorCore on v7x
    return 32 * 1024 * 1024       # safe default elsewhere


# ---------------------------------------------------------------------------
# Kernel 1: fused Q/K/V projection
#   q = (x @ Wq^T + bq) * q_scale ; k = x @ Wk^T + bk ; v = x @ Wv^T + bv
# Weights stay in their native nn.Linear [N, K] layout (no wrapper transpose);
# the x tile is shared by all three MXU matmuls per grid step.
# ---------------------------------------------------------------------------
def _qkv_proj_kernel(x_ref, wq_ref, wk_ref, wv_ref, bq_ref, bk_ref, bv_ref,
                     q_out, k_out, v_out, acc_q, acc_k, acc_v, *, q_scale):
    kk = pl.program_id(2)

    @pl.when(kk == 0)
    def _():
        acc_q[...] = jnp.zeros_like(acc_q)
        acc_k[...] = jnp.zeros_like(acc_k)
        acc_v[...] = jnp.zeros_like(acc_v)

    x = x_ref[...]                                    # [tm, tk]
    dn = (((1,), (1,)), ((), ()))                     # contract last dims (x @ W^T)
    acc_q[...] += lax.dot_general(x, wq_ref[...], dn, preferred_element_type=jnp.float32)
    acc_k[...] += lax.dot_general(x, wk_ref[...], dn, preferred_element_type=jnp.float32)
    acc_v[...] += lax.dot_general(x, wv_ref[...], dn, preferred_element_type=jnp.float32)

    @pl.when(kk == pl.num_programs(2) - 1)
    def _():
        bq = bq_ref[...].astype(jnp.float32)
        bk = bk_ref[...].astype(jnp.float32)
        bv = bv_ref[...].astype(jnp.float32)
        # 1/sqrt(head_dim) folded into q here (free in the epilogue).
        q_out[...] = ((acc_q[...] + bq) * q_scale).astype(q_out.dtype)
        k_out[...] = (acc_k[...] + bk).astype(k_out.dtype)
        v_out[...] = (acc_v[...] + bv).astype(v_out.dtype)


def pallas_qkv_projection(x2d, wq, wk, wv, bq, bk, bv, *, q_scale,
                          tm=512, tn=256, tk=512):
    """x2d: [M, K]; w*: [N, K] (native nn.Linear layout); b*: [N].
    Returns (q, k, v), each [M, N]; q is pre-scaled by q_scale."""
    M, K = x2d.shape
    N = wq.shape[0]
    dtype = x2d.dtype
    itemsize = jnp.dtype(dtype).itemsize

    # Keep all three weight matrices resident in VMEM when they comfortably
    # fit: constant weight index_map => fetched once, x streams exactly once.
    weights_resident = (3 * N * K * itemsize) <= (6 * 1024 * 1024)
    if weights_resident:
        tn_, tk_ = N, K
    else:
        tn_ = _pick_divisor_tile(N, tn, 128)
        tk_ = _pick_divisor_tile(K, tk, 128)

    # tm > tn (fewer weight re-fetches); pad the ragged row dim instead of
    # falling back to a full-array block.
    tm_ = min(tm, _round_up(M, 8))
    M_pad = _round_up(M, tm_)
    if M_pad != M:
        x2d = jnp.pad(x2d, ((0, M_pad - M), (0, 0)))

    grid = (M_pad // tm_, N // tn_, K // tk_)

    x_spec = pl.BlockSpec((tm_, tk_), lambda i, j, k: (i, k))
    w_spec = pl.BlockSpec((tn_, tk_), lambda i, j, k: (j, k))
    b_spec = pl.BlockSpec((1, tn_), lambda i, j, k: (0, j))
    o_spec = pl.BlockSpec((tm_, tn_), lambda i, j, k: (i, j))

    cost = pl.CostEstimate(
        flops=int(2 * M_pad * N * K * 3),
        transcendentals=0,
        bytes_accessed=int((M_pad * K + 3 * K * N + 3 * M_pad * N + 3 * N) * itemsize),
    )

    kernel = functools.partial(_qkv_proj_kernel, q_scale=q_scale)
    out_shapes = tuple(jax.ShapeDtypeStruct((M_pad, N), dtype) for _ in range(3))

    q, k, v = pl.pallas_call(
        kernel,
        out_shape=out_shapes,
        grid_spec=pltpu.PrefetchScalarGridSpec(
            num_scalar_prefetch=0,
            grid=grid,
            in_specs=[x_spec, w_spec, w_spec, w_spec, b_spec, b_spec, b_spec],
            out_specs=[o_spec, o_spec, o_spec],
            scratch_shapes=[pltpu.VMEM((tm_, tn_), jnp.float32) for _ in range(3)],
        ),
        compiler_params=pltpu.CompilerParams(
            dimension_semantics=("parallel", "parallel", "arbitrary"),
            vmem_limit_bytes=_vmem_limit_bytes(),
        ),
        cost_estimate=cost,
    )(x2d, wq, wk, wv, bq.reshape(1, N), bk.reshape(1, N), bv.reshape(1, N))

    if M_pad != M:
        q, k, v = q[:M], k[:M], v[:M]
    return q, k, v


# ---------------------------------------------------------------------------
# Kernel 2: flash-style attention, heads as a grid axis, layout [B, NH, S, Dh].
#   grid = (B, NH, q_tiles, kv_tiles); kv axis is the online-softmax reduction.
# ---------------------------------------------------------------------------
def _flash_attn_kernel(*refs, has_mask, use_approx_recip):
    if has_mask:
        q_ref, k_ref, v_ref, mask_ref, o_ref, m_ref, l_ref, acc_ref = refs
    else:
        q_ref, k_ref, v_ref, o_ref, m_ref, l_ref, acc_ref = refs
        mask_ref = None

    ki = pl.program_id(3)

    @pl.when(ki == 0)
    def _():
        m_ref[...] = jnp.full_like(m_ref, -jnp.inf)
        l_ref[...] = jnp.zeros_like(l_ref)
        acc_ref[...] = jnp.zeros_like(acc_ref)

    q = q_ref[0, 0]          # [tq, Dh]   (already scaled by 1/sqrt(Dh))
    k = k_ref[0, 0]          # [tkv, Dh]
    v = v_ref[0, 0]          # [tkv, Dh]

    # QK^T: contract on the last dims (no explicit transpose / relayout of k).
    s = lax.dot_general(q, k, (((1,), (1,)), ((), ())),
                        preferred_element_type=jnp.float32)          # [tq, tkv]
    if has_mask:
        s = s + mask_ref[0, 0]                                       # [1, tkv] bcast

    m_prev = m_ref[...]                                              # [tq, 1]
    m_new = jnp.maximum(m_prev, jnp.max(s, axis=-1, keepdims=True))
    m_new = jnp.maximum(m_new, _M_FLOOR)       # guard fully-masked tiles (finite)
    alpha = jnp.exp(m_prev - m_new)                                  # [tq, 1]
    p = jnp.exp(s - m_new)                                           # [tq, tkv]

    l_ref[...] = alpha * l_ref[...] + jnp.sum(p, axis=-1, keepdims=True)
    # Full-width accumulator rescale + PV matmul (contraction depth = tkv).
    acc_ref[...] = alpha * acc_ref[...] + jnp.dot(
        p.astype(v.dtype), v, preferred_element_type=jnp.float32)    # [tq, Dh]
    m_ref[...] = m_new

    # TODO(synk): attention-probs dropout / head_mask are identity (eval semantics).
    @pl.when(ki == pl.num_programs(3) - 1)
    def _():
        if use_approx_recip:
            inv = pl.reciprocal(l_ref[...], approx=True)
        else:
            inv = 1.0 / l_ref[...]
        # single lane-dense store of the whole [tq, Dh] block
        o_ref[0, 0] = (acc_ref[...] * inv).astype(o_ref.dtype)


def pallas_flash_attention(q4, k4, v4, mask, *, tq=128, tkv=256,
                           use_approx_recip=False):
    """q4/k4/v4: [B, NH, S, Dh]; mask: additive [B, 1, 1, S] (or None).
    Returns context [B, NH, S, Dh]."""
    B, NH, S, Dh = q4.shape
    itemsize = jnp.dtype(q4.dtype).itemsize

    # kv tile must be a multiple of 128 (mask block lane dim) unless it spans
    # the whole (padded) sequence; q tile divides the kv tile.
    tkv_ = min(tkv, _round_up(S, 128))
    tq_ = min(tq, tkv_)
    S_pad = _round_up(S, tkv_)

    if S_pad != S:
        pad = ((0, 0), (0, 0), (0, S_pad - S), (0, 0))
        q4 = jnp.pad(q4, pad)
        k4 = jnp.pad(k4, pad)
        v4 = jnp.pad(v4, pad)

    # Mask-less fast path only when there is no user mask AND no key padding.
    has_mask = (mask is not None) or (S_pad != S)
    if has_mask:
        if mask is None:
            mask = jnp.zeros((B, 1, 1, S), dtype=jnp.float32)
        mask = jnp.broadcast_to(mask.astype(jnp.float32), (B, 1, 1, S))
        if S_pad != S:
            mask = jnp.pad(mask, ((0, 0), (0, 0), (0, 0), (0, S_pad - S)),
                           constant_values=_NEG_PAD)

    grid = (B, NH, S_pad // tq_, S_pad // tkv_)

    qo_spec = pl.BlockSpec((1, 1, tq_, Dh), lambda b, h, qi, ki: (b, h, qi, 0))
    kv_spec = pl.BlockSpec((1, 1, tkv_, Dh), lambda b, h, qi, ki: (b, h, ki, 0))
    in_specs = [qo_spec, kv_spec, kv_spec]
    operands = [q4, k4, v4]
    if has_mask:
        in_specs.append(pl.BlockSpec((1, 1, 1, tkv_),
                                     lambda b, h, qi, ki: (b, 0, 0, ki)))
        operands.append(mask)

    cost = pl.CostEstimate(
        flops=int(4 * B * NH * S_pad * S_pad * Dh),
        transcendentals=int(B * NH * S_pad * S_pad),
        bytes_accessed=int(4 * B * NH * S_pad * Dh * itemsize + B * S_pad * 4),
    )

    kernel = functools.partial(_flash_attn_kernel, has_mask=has_mask,
                               use_approx_recip=use_approx_recip)

    out = pl.pallas_call(
        kernel,
        out_shape=jax.ShapeDtypeStruct((B, NH, S_pad, Dh), q4.dtype),
        grid_spec=pltpu.PrefetchScalarGridSpec(
            num_scalar_prefetch=0,
            grid=grid,
            in_specs=in_specs,
            out_specs=qo_spec,
            scratch_shapes=[
                pltpu.VMEM((tq_, 1), jnp.float32),    # running max per row
                pltpu.VMEM((tq_, 1), jnp.float32),    # running sum per row
                pltpu.VMEM((tq_, Dh), jnp.float32),   # un-normalized context
            ],
        ),
        compiler_params=pltpu.CompilerParams(
            dimension_semantics=("parallel", "parallel", "parallel", "arbitrary"),
            vmem_limit_bytes=_vmem_limit_bytes(),
        ),
        cost_estimate=cost,
    )(*operands)

    if S_pad != S:
        out = out[:, :, :S, :]
    return out


# ---------------------------------------------------------------------------
# Module wrapper
# ---------------------------------------------------------------------------
def distributed_self_attention_forward(hidden_states, params, num_heads,
                                       attention_mask=None,
                                       use_approx_recip=False):
    """hidden_states: [B, S, H]; returns context_layer [B, S, H]."""
    B, S, H = hidden_states.shape
    Dh = H // num_heads
    scale = 1.0 / math.sqrt(Dh)

    x2d = hidden_states.reshape(B * S, H)
    q2d, k2d, v2d = pallas_qkv_projection(
        x2d,
        params["wq"], params["wk"], params["wv"],      # native [N, K], no .T
        params["bq"], params["bk"], params["bv"],
        q_scale=scale,
    )

    def to_heads(t):
        return t.reshape(B, S, num_heads, Dh).transpose(0, 2, 1, 3)

    q4, k4, v4 = to_heads(q2d), to_heads(k2d), to_heads(v2d)

    ctx = pallas_flash_attention(q4, k4, v4, attention_mask,
                                 use_approx_recip=use_approx_recip)
    return ctx.transpose(0, 2, 1, 3).reshape(B, S, H)


# ---------------------------------------------------------------------------
# Pure-JAX reference for verification
# ---------------------------------------------------------------------------
def _reference(hidden_states, params, num_heads, attention_mask):
    B, S, H = hidden_states.shape
    Dh = H // num_heads
    q = hidden_states @ params["wq"].T + params["bq"]
    k = hidden_states @ params["wk"].T + params["bk"]
    v = hidden_states @ params["wv"].T + params["bv"]

    def split(t):
        return t.reshape(B, S, num_heads, Dh).transpose(0, 2, 1, 3)

    q, k, v = split(q), split(k), split(v)
    scores = jnp.einsum("bhqd,bhkd->bhqk", q, k) / math.sqrt(Dh)
    if attention_mask is not None:
        scores = scores + attention_mask
    probs = jax.nn.softmax(scores, axis=-1)
    ctx = jnp.einsum("bhqk,bhkd->bhqd", probs, v)
    return ctx.transpose(0, 2, 1, 3).reshape(B, S, H)


if __name__ == "__main__":
    # --- test 1: small shapes, HF-style additive mask, padded sequence path ---
    B, S, H, NUM_HEADS = 2, 8, 32, 4

    key = jax.random.PRNGKey(0)
    kx, kq, kk, kv, kbq, kbk, kbv, kx2 = jax.random.split(key, 8)

    hidden_states = jax.random.normal(kx, (B, S, H), dtype=jnp.float32)
    wscale = 1.0 / math.sqrt(H)
    params = {
        "wq": jax.random.normal(kq, (H, H), dtype=jnp.float32) * wscale,
        "wk": jax.random.normal(kk, (H, H), dtype=jnp.float32) * wscale,
        "wv": jax.random.normal(kv, (H, H), dtype=jnp.float32) * wscale,
        "bq": jax.random.normal(kbq, (H,), dtype=jnp.float32) * 0.1,
        "bk": jax.random.normal(kbk, (H,), dtype=jnp.float32) * 0.1,
        "bv": jax.random.normal(kbv, (H,), dtype=jnp.float32) * 0.1,
    }

    # HF-style additive attention mask [B, 1, 1, S]: mask last 2 keys of batch 1.
    mask = jnp.zeros((B, 1, 1, S), dtype=jnp.float32)
    mask = mask.at[1, 0, 0, -2:].set(-10000.0)

    out = distributed_self_attention_forward(hidden_states, params, NUM_HEADS, mask)
    out = jax.block_until_ready(out)
    ref = _reference(hidden_states, params, NUM_HEADS, mask)
    assert out.shape == (B, S, H)
    assert jnp.allclose(out, ref, atol=1e-4, rtol=1e-4), "mismatch vs reference (masked)"

    # --- test 2: no mask, S a multiple of 128 -> exercises the maskless kernel ---
    B2, S2 = 1, 128
    hs2 = jax.random.normal(kx2, (B2, S2, H), dtype=jnp.float32)
    out2 = distributed_self_attention_forward(hs2, params, NUM_HEADS, None)
    out2 = jax.block_until_ready(out2)
    ref2 = _reference(hs2, params, NUM_HEADS, None)
    assert jnp.allclose(out2, ref2, atol=1e-4, rtol=1e-4), "mismatch vs reference (no mask)"

    print("KERNEL_OK")
</pallas_src>

<mosaic_0001>
module attributes {stable_mosaic.version = 11 : i64} {
  func.func @_qkv_proj_kernel(%arg0: i32, %arg1: i32, %arg2: i32, %arg3: memref<16x32xf32, #tpu.memory_space<vmem>>, %arg4: memref<32x32xf32, #tpu.memory_space<vmem>>, %arg5: memref<32x32xf32, #tpu.memory_space<vmem>>, %arg6: memref<32x32xf32, #tpu.memory_space<vmem>>, %arg7: memref<1x32xf32, #tpu.memory_space<vmem>>, %arg8: memref<1x32xf32, #tpu.memory_space<vmem>>, %arg9: memref<1x32xf32, #tpu.memory_space<vmem>>, %arg10: memref<16x32xf32, #tpu.memory_space<vmem>>, %arg11: memref<16x32xf32, #tpu.memory_space<vmem>>, %arg12: memref<16x32xf32, #tpu.memory_space<vmem>>, %arg13: memref<16x32xf32, #tpu.memory_space<vmem>>, %arg14: memref<16x32xf32, #tpu.memory_space<vmem>>, %arg15: memref<16x32xf32, #tpu.memory_space<vmem>>) attributes {dimension_semantics = [#tpu.dimension_semantics<parallel>, #tpu.dimension_semantics<parallel>, #tpu.dimension_semantics<arbitrary>], iteration_bounds = array<i64: 1, 1, 1>, scalar_prefetch = 0 : i64, scratch_operands = 3 : i64, tpu.core_type = #tpu.core_type<tc>, window_params = [{transform_indices = @transform_0, window_bounds = array<i64: 16, 32>}, {transform_indices = @transform_1, window_bounds = array<i64: 32, 32>}, {transform_indices = @transform_2, window_bounds = array<i64: 32, 32>}, {transform_indices = @transform_3, window_bounds = array<i64: 32, 32>}, {transform_indices = @transform_4, window_bounds = array<i64: 1, 32>}, {transform_indices = @transform_5, window_bounds = array<i64: 1, 32>}, {transform_indices = @transform_6, window_bounds = array<i64: 1, 32>}, {transform_indices = @transform_7, window_bounds = array<i64: 16, 32>}, {transform_indices = @transform_8, window_bounds = array<i64: 16, 32>}, {transform_indices = @transform_9, window_bounds = array<i64: 16, 32>}]} {
    %c0_i32 = arith.constant 0 : i32
    %0 = arith.cmpi eq, %arg2, %c0_i32 : i32
    %1 = arith.extui %0 : i1 to i32
    %c0_i32_0 = arith.constant 0 : i32
    %2 = arith.cmpi ne, %1, %c0_i32_0 : i32
    scf.if %2 {
      %cst_24 = arith.constant 0.000000e+00 : f32
      %22 = vector.broadcast %cst_24 : f32 to vector<16x32xf32>
      %c0_25 = arith.constant 0 : index
      %c0_26 = arith.constant 0 : index
      %23 = vector.load %arg13[%c0_25, %c0_26] : memref<16x32xf32, #tpu.memory_space<vmem>>, vector<16x32xf32>
      tpu.vector_store %arg13[%c0_25, %c0_26], %22 {strides = array<i32>} : memref<16x32xf32, #tpu.memory_space<vmem>>, vector<16x32xf32>,
      %cst_27 = arith.constant 0.000000e+00 : f32
      %24 = vector.broadcast %cst_27 : f32 to vector<16x32xf32>
      %c0_28 = arith.constant 0 : index
      %c0_29 = arith.constant 0 : index
      %25 = vector.load %arg14[%c0_28, %c0_29] : memref<16x32xf32, #tpu.memory_space<vmem>>, vector<16x32xf32>
      tpu.vector_store %arg14[%c0_28, %c0_29], %24 {strides = array<i32>} : memref<16x32xf32, #tpu.memory_space<vmem>>, vector<16x32xf32>,
      %cst_30 = arith.constant 0.000000e+00 : f32
      %26 = vector.broadcast %cst_30 : f32 to vector<16x32xf32>
      %c0_31 = arith.constant 0 : index
      %c0_32 = arith.constant 0 : index
      %27 = vector.load %arg15[%c0_31, %c0_32] : memref<16x32xf32, #tpu.memory_space<vmem>>, vector<16x32xf32>
      tpu.vector_store %arg15[%c0_31, %c0_32], %26 {strides = array<i32>} : memref<16x32xf32, #tpu.memory_space<vmem>>, vector<16x32xf32>,
    } else {
    }
    %c0 = arith.constant 0 : index
    %c0_1 = arith.constant 0 : index
    %3 = vector.load %arg3[%c0, %c0_1] : memref<16x32xf32, #tpu.memory_space<vmem>>, vector<16x32xf32>
    %c0_2 = arith.constant 0 : index
    %c0_3 = arith.constant 0 : index
    %4 = vector.load %arg13[%c0_2, %c0_3] : memref<16x32xf32, #tpu.memory_space<vmem>>, vector<16x32xf32>
    %c0_4 = arith.constant 0 : index
    %c0_5 = arith.constant 0 : index
    %5 = vector.load %arg4[%c0_4, %c0_5] : memref<32x32xf32, #tpu.memory_space<vmem>>, vector<32x32xf32>
    %cst = arith.constant dense<0.000000e+00> : vector<16x32xf32>
    %6 = tpu.matmul %3, %5, %cst {dimension_numbers = #tpu.dot_dimension_numbers<[1], [1], [0], [0], [0, 0, 1, 0], [], []>} : vector<16x32xf32>, vector<32x32xf32>, vector<16x32xf32> -> vector<16x32xf32>
    %7 = arith.addf %4, %6 : vector<16x32xf32>
    %c0_6 = arith.constant 0 : index
    %c0_7 = arith.constant 0 : index
    %8 = vector.load %arg13[%c0_6, %c0_7] : memref<16x32xf32, #tpu.memory_space<vmem>>, vector<16x32xf32>
    tpu.vector_store %arg13[%c0_6, %c0_7], %7 {strides = array<i32>} : memref<16x32xf32, #tpu.memory_space<vmem>>, vector<16x32xf32>,
    %c0_8 = arith.constant 0 : index
    %c0_9 = arith.constant 0 : index
    %9 = vector.load %arg14[%c0_8, %c0_9] : memref<16x32xf32, #tpu.memory_space<vmem>>, vector<16x32xf32>
    %c0_10 = arith.constant 0 : index
    %c0_11 = arith.constant 0 : index
    %10 = vector.load %arg5[%c0_10, %c0_11] : memref<32x32xf32, #tpu.memory_space<vmem>>, vector<32x32xf32>
    %cst_12 = arith.constant dense<0.000000e+00> : vector<16x32xf32>
    %11 = tpu.matmul %3, %10, %cst_12 {dimension_numbers = #tpu.dot_dimension_numbers<[1], [1], [0], [0], [0, 0, 1, 0], [], []>} : vector<16x32xf32>, vector<32x32xf32>, vector<16x32xf32> -> vector<16x32xf32>
    %12 = arith.addf %9, %11 : vector<16x32xf32>
    %c0_13 = arith.constant 0 : index
    %c0_14 = arith.constant 0 : index
    %13 = vector.load %arg14[%c0_13, %c0_14] : memref<16x32xf32, #tpu.memory_space<vmem>>, vector<16x32xf32>
    tpu.vector_store %arg14[%c0_13, %c0_14], %12 {strides = array<i32>} : memref<16x32xf32, #tpu.memory_space<vmem>>, vector<16x32xf32>,
    %c0_15 = arith.constant 0 : index
    %c0_16 = arith.constant 0 : index
    %14 = vector.load %arg15[%c0_15, %c0_16] : memref<16x32xf32, #tpu.memory_space<vmem>>, vector<16x32xf32>
    %c0_17 = arith.constant 0 : index
    %c0_18 = arith.constant 0 : index
    %15 = vector.load %arg6[%c0_17, %c0_18] : memref<32x32xf32, #tpu.memory_space<vmem>>, vector<32x32xf32>
    %cst_19 = arith.constant dense<0.000000e+00> : vector<16x32xf32>
    %16 = tpu.matmul %3, %15, %cst_19 {dimension_numbers = #tpu.dot_dimension_numbers<[1], [1], [0], [0], [0, 0, 1, 0], [], []>} : vector<16x32xf32>, vector<32x32xf32>, vector<16x32xf32> -> vector<16x32xf32>
    %17 = arith.addf %14, %16 : vector<16x32xf32>
    %c0_20 = arith.constant 0 : index
    %c0_21 = arith.constant 0 : index
    %18 = vector.load %arg15[%c0_20, %c0_21] : memref<16x32xf32, #tpu.memory_space<vmem>>, vector<16x32xf32>
    tpu.vector_store %arg15[%c0_20, %c0_21], %17 {strides = array<i32>} : memref<16x32xf32, #tpu.memory_space<vmem>>, vector<16x32xf32>,
    %c0_i32_22 = arith.constant 0 : i32
    %19 = arith.cmpi eq, %arg2, %c0_i32_22 : i32
    %20 = arith.extui %19 : i1 to i32
    %c0_i32_23 = arith.constant 0 : i32
    %21 = arith.cmpi ne, %20, %c0_i32_23 : i32
    scf.if %21 {
      %c0_24 = arith.constant 0 : index
      %c0_25 = arith.constant 0 : index
      %22 = vector.load %arg7[%c0_24, %c0_25] : memref<1x32xf32, #tpu.memory_space<vmem>>, vector<1x32xf32>
      %c0_26 = arith.constant 0 : index
      %c0_27 = arith.constant 0 : index
      %23 = vector.load %arg8[%c0_26, %c0_27] : memref<1x32xf32, #tpu.memory_space<vmem>>, vector<1x32xf32>
      %c0_28 = arith.constant 0 : index
      %c0_29 = arith.constant 0 : index
      %24 = vector.load %arg9[%c0_28, %c0_29] : memref<1x32xf32, #tpu.memory_space<vmem>>, vector<1x32xf32>
      %c0_30 = arith.constant 0 : index
      %c0_31 = arith.constant 0 : index
      %25 = vector.load %arg13[%c0_30, %c0_31] : memref<16x32xf32, #tpu.memory_space<vmem>>, vector<16x32xf32>
      %26 = vector.broadcast %22 : vector<1x32xf32> to vector<16x32xf32>
      %27 = arith.addf %25, %26 : vector<16x32xf32>
      %cst_32 = arith.constant 0.353553385 : f32
      %28 = vector.broadcast %cst_32 : f32 to vector<16x32xf32>
      %29 = arith.mulf %27, %28 : vector<16x32xf32>
      %c0_33 = arith.constant 0 : index
      %c0_34 = arith.constant 0 : index
      %30 = vector.load %arg10[%c0_33, %c0_34] : memref<16x32xf32, #tpu.memory_space<vmem>>, vector<16x32xf32>
      tpu.vector_store %arg10[%c0_33, %c0_34], %29 {strides = array<i32>} : memref<16x32xf32, #tpu.memory_space<vmem>>, vector<16x32xf32>,
      %c0_35 = arith.constant 0 : index
      %c0_36 = arith.constant 0 : index
      %31 = vector.load %arg14[%c0_35, %c0_36] : memref<16x32xf32, #tpu.memory_space<vmem>>, vector<16x32xf32>
      %32 = vector.broadcast %23 : vector<1x32xf32> to vector<16x32xf32>
      %33 = arith.addf %31, %32 : vector<16x32xf32>
      %c0_37 = arith.constant 0 : index
      %c0_38 = arith.constant 0 : index
      %34 = vector.load %arg11[%c0_37, %c0_38] : memref<16x32xf32, #tpu.memory_space<vmem>>, vector<16x32xf32>
      tpu.vector_store %arg11[%c0_37, %c0_38], %33 {strides = array<i32>} : memref<16x32xf32, #tpu.memory_space<vmem>>, vector<16x32xf32>,
      %c0_39 = arith.constant 0 : index
      %c0_40 = arith.constant 0 : index
      %35 = vector.load %arg15[%c0_39, %c0_40] : memref<16x32xf32, #tpu.memory_space<vmem>>, vector<16x32xf32>
      %36 = vector.broadcast %24 : vector<1x32xf32> to vector<16x32xf32>
      %37 = arith.addf %35, %36 : vector<16x32xf32>
      %c0_41 = arith.constant 0 : index
      %c0_42 = arith.constant 0 : index
      %38 = vector.load %arg12[%c0_41, %c0_42] : memref<16x32xf32, #tpu.memory_space<vmem>>, vector<16x32xf32>
      tpu.vector_store %arg12[%c0_41, %c0_42], %37 {strides = array<i32>} : memref<16x32xf32, #tpu.memory_space<vmem>>, vector<16x32xf32>,
    } else {
    }
    return
  }
  func.func @transform_0(%arg0: i32, %arg1: i32, %arg2: i32) -> (i32, i32) {
    %c0_i32 = arith.constant 0 : i32
    return %arg0, %arg2 : i32, i32
  }
  func.func @transform_1(%arg0: i32, %arg1: i32, %arg2: i32) -> (i32, i32) {
    %c0_i32 = arith.constant 0 : i32
    return %arg1, %arg2 : i32, i32
  }
  func.func @transform_2(%arg0: i32, %arg1: i32, %arg2: i32) -> (i32, i32) {
    %c0_i32 = arith.constant 0 : i32
    return %arg1, %arg2 : i32, i32
  }
  func.func @transform_3(%arg0: i32, %arg1: i32, %arg2: i32) -> (i32, i32) {
    %c0_i32 = arith.constant 0 : i32
    return %arg1, %arg2 : i32, i32
  }
  func.func @transform_4(%arg0: i32, %arg1: i32, %arg2: i32) -> (i32, i32) {
    %c0_i32 = arith.constant 0 : i32
    %c0_i32_0 = arith.constant 0 : i32
    return %c0_i32, %arg1 : i32, i32
  }
  func.func @transform_5(%arg0: i32, %arg1: i32, %arg2: i32) -> (i32, i32) {
    %c0_i32 = arith.constant 0 : i32
    %c0_i32_0 = arith.constant 0 : i32
    return %c0_i32, %arg1 : i32, i32
  }
  func.func @transform_6(%arg0: i32, %arg1: i32, %arg2: i32) -> (i32, i32) {
    %c0_i32 = arith.constant 0 : i32
    %c0_i32_0 = arith.constant 0 : i32
    return %c0_i32, %arg1 : i32, i32
  }
  func.func @transform_7(%arg0: i32, %arg1: i32, %arg2: i32) -> (i32, i32) {
    %c0_i32 = arith.constant 0 : i32
    return %arg0, %arg1 : i32, i32
  }
  func.func @transform_8(%arg0: i32, %arg1: i32, %arg2: i32) -> (i32, i32) {
    %c0_i32 = arith.constant 0 : i32
    return %arg0, %arg1 : i32, i32
  }
  func.func @transform_9(%arg0: i32, %arg1: i32, %arg2: i32) -> (i32, i32) {
    %c0_i32 = arith.constant 0 : i32
    return %arg0, %arg1 : i32, i32
  }
}

</mosaic_0001>

<llo_original>
// kernel: tpu_custom_call.1
$region0: #{tpu_custom_call.1}
  #allocation0 [shape = 'u32[]', space=smem, size = 0x4, offset = 0x4, fixed_abs, tag = 'smem constant byte address 0x4 - core index']
  #allocation1 [shape = 'u32[144,128]{1,0:T(1,128)}', space=vmem, size = 0x12000, scoped, tag = 'internal scratch']
  #allocation2 [shape = 'f32[16,32]{1,0:T(8,128)}', space=vmem, size = 0x2000, scoped, tag = 'scratch operand']
  #allocation3 [shape = 'f32[16,32]{1,0:T(8,128)}', space=vmem, size = 0x2000, scoped, tag = 'scratch operand']
  #allocation4 [shape = 'f32[16,32]{1,0:T(8,128)}', space=vmem, size = 0x2000, scoped, tag = 'scratch operand']
  %s0 = inlined_call_operand.hbm [shape: f32[16,32], index: 0, kind: input, shape index: {}]
  %s1 = inlined_call_operand.hbm [shape: f32[32,32], index: 1, kind: input, shape index: {}]
  %s2 = inlined_call_operand.hbm [shape: f32[32,32], index: 2, kind: input, shape index: {}]
  %s3 = inlined_call_operand.hbm [shape: f32[32,32], index: 3, kind: input, shape index: {}]
  %s4 = inlined_call_operand.vmem [shape: f32[1,32], index: 4, kind: input, shape index: {}]
  %s5 = inlined_call_operand.vmem [shape: f32[1,32], index: 5, kind: input, shape index: {}]
  %s6 = inlined_call_operand.vmem [shape: f32[1,32], index: 6, kind: input, shape index: {}]
  %s7 = inlined_call_operand.hbm [shape: f32[16,32], index: 7, kind: output, shape index: {0}]
  %s8 = inlined_call_operand.hbm [shape: f32[16,32], index: 8, kind: output, shape index: {1}]
  %s9 = inlined_call_operand.hbm [shape: f32[16,32], index: 9, kind: output, shape index: {2}]
  %10 = xla_tuple %s7, %s8, %s9
  %s11 = sld [smem:[#allocation0]]
  $region78: #{tpu_custom_call.1} parent=0
    _
  %s13 = ssub.s32 1, %s11
  %s14 = scalar_select 0, %s13, %s11
  $region1: #{tpu_custom_call.1} parent=0
    #allocation5 [shape = 'u8[8192]{0}', space=vmem, size = 0x2000, scoped, tag = 'input window, operand 0, single buffered']
    #allocation6 [shape = 's32[1]{0}', space=sflag, size = 0x4, scoped, tag = 'scoped memory for tpu_custom_call.1']
    #allocation7 [shape = 's32[1]{0}', space=sflag, size = 0x4, scoped, tag = 'scoped memory for tpu_custom_call.1']
    #allocation8 [shape = 'u8[16384]{0}', space=vmem, size = 0x4000, scoped, tag = 'input window, operand 1, single buffered']
    #allocation9 [shape = 's32[1]{0}', space=sflag, size = 0x4, scoped, tag = 'scoped memory for tpu_custom_call.1']
    #allocation10 [shape = 'u8[16384]{0}', space=vmem, size = 0x4000, scoped, tag = 'input window, operand 2, single buffered']
    #allocation11 [shape = 'u8[16384]{0}', space=vmem, size = 0x4000, scoped, tag = 'input window, operand 3, single buffered']
    #allocation12 [shape = 's32[1]{0}', space=sflag, size = 0x4, scoped, tag = 'scoped memory for tpu_custom_call.1']
    #allocation13 [shape = 'u8[8192]{0}', space=vmem, size = 0x2000, scoped, tag = 'output window, operand 0, single buffered']
    #allocation14 [shape = 'u8[8192]{0}', space=vmem, size = 0x2000, scoped, tag = 'output window, operand 1, single buffered']
    #allocation15 [shape = 's32[1]{0}', space=sflag, size = 0x4, scoped, tag = 'scoped memory for tpu_custom_call.1']
    #allocation16 [shape = 'u8[8192]{0}', space=vmem, size = 0x2000, scoped, tag = 'output window, operand 2, single buffered']
    %15 = vsyncpa [#allocation6], 0
    %16 = vsyncpa [#allocation9], 0
    %17 = vsyncpa [#allocation12], 0
    %18 = vsyncpa [#allocation7], 0
    %19 = vsyncpa [#allocation15], 0
    // Predicated region
    $region2: #{tpu_custom_call.1} parent=1 // pred_check
      _
    $region3: #{tpu_custom_call.1} parent=1 // pred_check_branch
      %21 = sbr.rel (0) target = $region5
    $region4: #{tpu_custom_call.1} parent=1 // pred_region
      %s23 = ssub.s32 256, 256
      %24 = vsyncadd [#allocation6], %s23
      %s25 = sshll.u32 [#allocation5], 4
      %s26 = int_to_ptr.vmem [resolvable:$true] %s25
      %31 = dma.hbm_to_vmem [thread:$0]  %s0, 256, %s26, [#allocation6], 128, 128, 8
    $region5: #{tpu_custom_call.1} parent=1 // pred_fallthru
      _
    // Predicated region
    $region6: #{tpu_custom_call.1} parent=1 // pred_check
      _
    $region7: #{tpu_custom_call.1} parent=1 // pred_check_branch
      %33 = sbr.rel (0) target = $region9
    $region8: #{tpu_custom_call.1} parent=1 // pred_region
      %s35 = ssub.s32 512, 512
      %36 = vsyncadd [#allocation9], %s35
      %s37 = sshll.u32 [#allocation8], 4
      %s38 = int_to_ptr.vmem [resolvable:$true] %s37
      %43 = dma.hbm_to_vmem [thread:$0]  %s1, 512, %s38, [#allocation9], 128, 128, 8
    $region9: #{tpu_custom_call.1} parent=1 // pred_fallthru
      _
    // Predicated region
    $region10: #{tpu_custom_call.1} parent=1 // pred_check
      _
    $region11: #{tpu_custom_call.1} parent=1 // pred_check_branch
      %45 = sbr.rel (0) target = $region13
    $region12: #{tpu_custom_call.1} parent=1 // pred_region
      %s47 = ssub.s32 512, 512
      %48 = vsyncadd [#allocation9], %s47
      %s49 = sshll.u32 [#allocation10], 4
      %s50 = int_to_ptr.vmem [resolvable:$true] %s49
      %55 = dma.hbm_to_vmem [thread:$0]  %s2, 512, %s50, [#allocation9], 128, 128, 8
    $region13: #{tpu_custom_call.1} parent=1 // pred_fallthru
      _
    // Predicated region
    $region14: #{tpu_custom_call.1} parent=1 // pred_check
      _
    $region15: #{tpu_custom_call.1} parent=1 // pred_check_branch
      %57 = sbr.rel (0) target = $region17
    $region16: #{tpu_custom_call.1} parent=1 // pred_region
      %s59 = ssub.s32 512, 512
      %60 = vsyncadd [#allocation12], %s59
      %s61 = sshll.u32 [#allocation11], 4
      %s62 = int_to_ptr.vmem [resolvable:$true] %s61
      %67 = dma.hbm_to_vmem [thread:$0]  %s3, 512, %s62, [#allocation12], 128, 128, 8
    $region17: #{tpu_custom_call.1} parent=1 // pred_fallthru
      _
    // Predicated region
    $region18: #{tpu_custom_call.1} parent=1 // pred_check
      _
    $region19: #{tpu_custom_call.1} parent=1 // pred_check_branch
      %69 = sbr.rel (0) target = $region21
    $region20: #{tpu_custom_call.1} parent=1 // pred_region
      _
    $region21: #{tpu_custom_call.1} parent=1 // pred_fallthru
      _
    // Predicated region
    $region22: #{tpu_custom_call.1} parent=1 // pred_check
      _
    $region23: #{tpu_custom_call.1} parent=1 // pred_check_branch
      %71 = sbr.rel (0) target = $region25
    $region24: #{tpu_custom_call.1} parent=1 // pred_region
      _
    $region25: #{tpu_custom_call.1} parent=1 // pred_fallthru
      _
    // Predicated region
    $region26: #{tpu_custom_call.1} parent=1 // pred_check
      _
    $region27: #{tpu_custom_call.1} parent=1 // pred_check_branch
      %73 = sbr.rel (0) target = $region29
    $region28: #{tpu_custom_call.1} parent=1 // pred_region
      _
    $region29: #{tpu_custom_call.1} parent=1 // pred_fallthru
      _
    // Predicated region
    $region30: #{tpu_custom_call.1} parent=1 // pred_check
      _
    $region31: #{tpu_custom_call.1} parent=1 // pred_check_branch
      %75 = sbr.rel (0) target = $region33
    $region32: #{tpu_custom_call.1} parent=1 // pred_region
      %76 = dma.done [#allocation6], 256
    $region33: #{tpu_custom_call.1} parent=1 // pred_fallthru
      _
    // Predicated region
    $region34: #{tpu_custom_call.1} parent=1 // pred_check
      _
    $region35: #{tpu_custom_call.1} parent=1 // pred_check_branch
      %78 = sbr.rel (0) target = $region37
    $region36: #{tpu_custom_call.1} parent=1 // pred_region
      %79 = dma.done [#allocation9], 512
    $region37: #{tpu_custom_call.1} parent=1 // pred_fallthru
      _
    // Predicated region
    $region38: #{tpu_custom_call.1} parent=1 // pred_check
      _
    $region39: #{tpu_custom_call.1} parent=1 // pred_check_branch
      %81 = sbr.rel (0) target = $region41
    $region40: #{tpu_custom_call.1} parent=1 // pred_region
      %82 = dma.done [#allocation9], 512
    $region41: #{tpu_custom_call.1} parent=1 // pred_fallthru
      _
    // Predicated region
    $region42: #{tpu_custom_call.1} parent=1 // pred_check
      _
    $region43: #{tpu_custom_call.1} parent=1 // pred_check_branch
      %84 = sbr.rel (0) target = $region45
    $region44: #{tpu_custom_call.1} parent=1 // pred_region
      %85 = dma.done [#allocation12], 512
    $region45: #{tpu_custom_call.1} parent=1 // pred_fallthru
      _
    %p86 = scmp.eq.s32.totalorder 0, 0
    // Predicated region
    $region46: #{tpu_custom_call.1} parent=1 // pred_check
      %p87 = pneg %p86
    $region47: #{tpu_custom_call.1} parent=1 // pred_check_branch
      %89 = sbr.rel (%p87) target = $region49
    $region48: #{tpu_custom_call.1} parent=1 // pred_region
      %vm90 = vcmask 261120
      %91 = vst.msk [vmem:[#allocation2] sm:$0xff] %vm90, 0.0
      %92 = vst.msk [vmem:[#allocation2 + $0x8] sm:$0xff] %vm90, 0.0
      %93 = vst.msk [vmem:[#allocation3] sm:$0xff] %vm90, 0.0
      %94 = vst.msk [vmem:[#allocation3 + $0x8] sm:$0xff] %vm90, 0.0
      %95 = vst.msk [vmem:[#allocation4] sm:$0xff] %vm90, 0.0
      %96 = vst.msk [vmem:[#allocation4 + $0x8] sm:$0xff] %vm90, 0.0
    $region49: #{tpu_custom_call.1} parent=1 // pred_fallthru
      _
    %v97 = vld [vmem:[#allocation5] sm:$0xff]
    %v98 = vld [vmem:[#allocation5 + $0x8] sm:$0xff]
    %v99 = vld [vmem:[#allocation2] sm:$0xff]
    %v100 = vld [vmem:[#allocation2 + $0x8] sm:$0xff]
    %v101 = vld [vmem:[#allocation8] sm:$0xff]
    %v102 = vld [vmem:[#allocation8 + $0x8] sm:$0xff]
    %v103 = vld [vmem:[#allocation8 + $0x10] sm:$0xff]
    %v104 = vld [vmem:[#allocation8 + $0x18] sm:$0xff]
    %vm105 = vcmask 261120
    %v107 = vsel %vm105, %v97, 0
    %v110 = vsel %vm105, %v98, 0
    %v113 = vsel %vm105, %v101, 0
    %v116 = vsel %vm105, %v102, 0
    %v119 = vsel %vm105, %v103, 0
    %v122 = vsel %vm105, %v104, 0
    %124 = vmatprep.subr.mxu0 0.0
    %125 = vmatpush1.xpose.msra.mxu0 0.0
    %126 = vmatprep.subr.mxu0 0.0
    %127 = vmatpush1.xpose.msra.mxu0 0.0
    %128 = vmatprep.subr.mxu0 0.0
    %129 = vmatpush1.xpose.msra.mxu0 0.0
    %130 = vmatprep.subr.mxu0 0.0
    %131 = vmatpush1.xpose.msra.mxu0 0.0
    %132 = vmatprep.subr.mxu0 0.0
    %133 = vmatpush1.xpose.msra.mxu0 0.0
    %134 = vmatprep.subr.mxu0 0.0
    %135 = vmatpush1.xpose.msra.mxu0 0.0
    %136 = vmatprep.subr.mxu0 0.0
    %137 = vmatpush1.xpose.msra.mxu0 0.0
    %138 = vmatprep.subr.mxu0 0.0
    %139 = vmatpush1.xpose.msra.mxu0 0.0
    %140 = vmatprep.subr.mxu0 0.0
    %141 = vmatpush1.xpose.msra.mxu0 0.0
    %142 = vmatprep.subr.mxu0 0.0
    %143 = vmatpush1.xpose.msra.mxu0 0.0
    %144 = vmatprep.subr.mxu0 0.0
    %145 = vmatpush1.xpose.msra.mxu0 0.0
    %146 = vmatprep.subr.mxu0 0.0
    %147 = vmatpush1.xpose.msra.mxu0 0.0
    %148 = vmatprep.subr.mxu0 0.0
    %149 = vmatpush1.xpose.msra.mxu0 %v122
    %150 = vmatprep.subr.mxu0 0.0
    %151 = vmatpush1.xpose.msra.mxu0 %v119
    %152 = vmatprep.subr.mxu0 0.0
    %153 = vmatpush1.xpose.msra.mxu0 %v116
    %154 = vmatprep.subr.mxu0 0.0
    %155 = vmatpush1.xpose.msra.mxu0 %v113
    %156 = vmatprep.subr.mxu0 0.0
    %157 = vmatpush2.xpose.msra.mxu0 0.0
    %158 = vmatprep.subr.mxu0 0.0
    %159 = vmatpush2.xpose.msra.mxu0 0.0
    %160 = vmatprep.subr.mxu0 0.0
    %161 = vmatpush2.xpose.msra.mxu0 0.0
    %162 = vmatprep.subr.mxu0 0.0
    %163 = vmatpush2.xpose.msra.mxu0 0.0
    %164 = vmatprep.subr.mxu0 0.0
    %165 = vmatpush2.xpose.msra.mxu0 0.0
    %166 = vmatprep.subr.mxu0 0.0
    %167 = vmatpush2.xpose.msra.mxu0 0.0
    %168 = vmatprep.subr.mxu0 0.0
    %169 = vmatpush2.xpose.msra.mxu0 0.0
    %170 = vmatprep.subr.mxu0 0.0
    %171 = vmatpush2.xpose.msra.mxu0 0.0
    %172 = vmatprep.subr.mxu0 0.0
    %173 = vmatpush2.xpose.msra.mxu0 0.0
    %174 = vmatprep.subr.mxu0 0.0
    %175 = vmatpush2.xpose.msra.mxu0 0.0
    %176 = vmatprep.subr.mxu0 0.0
    %177 = vmatpush2.xpose.msra.mxu0 0.0
    %178 = vmatprep.subr.mxu0 0.0
    %179 = vmatpush2.xpose.msra.mxu0 0.0
    %180 = vmatprep.subr.mxu0 0.0
    %181 = vmatpush2.xpose.msra.mxu0 0.0
    %182 = vmatprep.subr.mxu0 0.0
    %183 = vmatpush2.xpose.msra.mxu0 0.0
    %184 = vmatprep.subr.mxu0 0.0
    %185 = vmatpush2.xpose.msra.mxu0 0.0
    %186 = vmatprep.subr.mxu0 0.0
    %187 = vmatpush2.xpose.msra.mxu0 0.0
    %188 = vmatprep.mubr.f32.mxu0 0.0
    %189 = vmatmul.mubr.f32.gmra.mxu0 %v107
    %v190 = vpop.f32.mrf.mxu0
    %v191 = vadd.f32 0.0, %v190
    %v192 = vpop.f32.mrf.mxu0
    %193 = vmatprep.mubr.f32.mxu0 0.0
    %194 = vmatmul.mubr.f32.gmra.mxu0 %v110
    %v195 = vpop.f32.mrf.mxu0
    %v196 = vadd.f32 0.0, %v195
    %v197 = vpop.f32.mrf.mxu0
    %198 = vdwg.mxu0
    %v199 = vadd.f32 %v99, %v191
    %v200 = vadd.f32 %v100, %v196
    %201 = vst.msk [vmem:[#allocation2] sm:$0xff] %vm105, %v199
    %202 = vst.msk [vmem:[#allocation2 + $0x8] sm:$0xff] %vm105, %v200
    %v203 = vld [vmem:[#allocation3] sm:$0xff]
    %v204 = vld [vmem:[#allocation3 + $0x8] sm:$0xff]
    %v205 = vld [vmem:[#allocation10] sm:$0xff]
    %v206 = vld [vmem:[#allocation10 + $0x8] sm:$0xff]
    %v207 = vld [vmem:[#allocation10 + $0x10] sm:$0xff]
    %v208 = vld [vmem:[#allocation10 + $0x18] sm:$0xff]
    %v210 = vsel %vm105, %v205, 0
    %v213 = vsel %vm105, %v206, 0
    %v216 = vsel %vm105, %v207, 0
    %v219 = vsel %vm105, %v208, 0
    %221 = vmatprep.subr.mxu0 0.0
    %222 = vmatpush1.xpose.msra.mxu0 0.0
    %223 = vmatprep.subr.mxu0 0.0
    %224 = vmatpush1.xpose.msra.mxu0 0.0
    %225 = vmatprep.subr.mxu0 0.0
    %226 = vmatpush1.xpose.msra.mxu0 0.0
    %227 = vmatprep.subr.mxu0 0.0
    %228 = vmatpush1.xpose.msra.mxu0 0.0
    %229 = vmatprep.subr.mxu0 0.0
    %230 = vmatpush1.xpose.msra.mxu0 0.0
    %231 = vmatprep.subr.mxu0 0.0
    %232 = vmatpush1.xpose.msra.mxu0 0.0
    %233 = vmatprep.subr.mxu0 0.0
    %234 = vmatpush1.xpose.msra.mxu0 0.0
    %235 = vmatprep.subr.mxu0 0.0
    %236 = vmatpush1.xpose.msra.mxu0 0.0
    %237 = vmatprep.subr.mxu0 0.0
    %238 = vmatpush1.xpose.msra.mxu0 0.0
    %239 = vmatprep.subr.mxu0 0.0
    %240 = vmatpush1.xpose.msra.mxu0 0.0
    %241 = vmatprep.subr.mxu0 0.0
    %242 = vmatpush1.xpose.msra.mxu0 0.0
    %243 = vmatprep.subr.mxu0 0.0
    %244 = vmatpush1.xpose.msra.mxu0 0.0
    %245 = vmatprep.subr.mxu0 0.0
    %246 = vmatpush1.xpose.msra.mxu0 %v219
    %247 = vmatprep.subr.mxu0 0.0
    %248 = vmatpush1.xpose.msra.mxu0 %v216
    %249 = vmatprep.subr.mxu0 0.0
    %250 = vmatpush1.xpose.msra.mxu0 %v213
    %251 = vmatprep.subr.mxu0 0.0
    %252 = vmatpush1.xpose.msra.mxu0 %v210
    %253 = vmatprep.subr.mxu0 0.0
    %254 = vmatpush2.xpose.msra.mxu0 0.0
    %255 = vmatprep.subr.mxu0 0.0
    %256 = vmatpush2.xpose.msra.mxu0 0.0
    %257 = vmatprep.subr.mxu0 0.0
    %258 = vmatpush2.xpose.msra.mxu0 0.0
    %259 = vmatprep.subr.mxu0 0.0
    %260 = vmatpush2.xpose.msra.mxu0 0.0
    %261 = vmatprep.subr.mxu0 0.0
    %262 = vmatpush2.xpose.msra.mxu0 0.0
    %263 = vmatprep.subr.mxu0 0.0
    %264 = vmatpush2.xpose.msra.mxu0 0.0
    %265 = vmatprep.subr.mxu0 0.0
    %266 = vmatpush2.xpose.msra.mxu0 0.0
    %267 = vmatprep.subr.mxu0 0.0
    %268 = vmatpush2.xpose.msra.mxu0 0.0
    %269 = vmatprep.subr.mxu0 0.0
    %270 = vmatpush2.xpose.msra.mxu0 0.0
    %271 = vmatprep.subr.mxu0 0.0
    %272 = vmatpush2.xpose.msra.mxu0 0.0
    %273 = vmatprep.subr.mxu0 0.0
    %274 = vmatpush2.xpose.msra.mxu0 0.0
    %275 = vmatprep.subr.mxu0 0.0
    %276 = vmatpush2.xpose.msra.mxu0 0.0
    %277 = vmatprep.subr.mxu0 0.0
    %278 = vmatpush2.xpose.msra.mxu0 0.0
    %279 = vmatprep.subr.mxu0 0.0
    %280 = vmatpush2.xpose.msra.mxu0 0.0
    %281 = vmatprep.subr.mxu0 0.0
    %282 = vmatpush2.xpose.msra.mxu0 0.0
    %283 = vmatprep.subr.mxu0 0.0
    %284 = vmatpush2.xpose.msra.mxu0 0.0
    %285 = vmatprep.mubr.f32.mxu0 0.0
    %286 = vmatmul.mubr.f32.gmra.mxu0 %v107
    %v287 = vpop.f32.mrf.mxu0
    %v288 = vadd.f32 0.0, %v287
    %v289 = vpop.f32.mrf.mxu0
    %290 = vmatprep.mubr.f32.mxu0 0.0
    %291 = vmatmul.mubr.f32.gmra.mxu0 %v110
    %v292 = vpop.f32.mrf.mxu0
    %v293 = vadd.f32 0.0, %v292
    %v294 = vpop.f32.mrf.mxu0
    %295 = vdwg.mxu0
    %v296 = vadd.f32 %v203, %v288
    %v297 = vadd.f32 %v204, %v293
    %298 = vst.msk [vmem:[#allocation3] sm:$0xff] %vm105, %v296
    %299 = vst.msk [vmem:[#allocation3 + $0x8] sm:$0xff] %vm105, %v297
    %v300 = vld [vmem:[#allocation4] sm:$0xff]
    %v301 = vld [vmem:[#allocation4 + $0x8] sm:$0xff]
    %v302 = vld [vmem:[#allocation11] sm:$0xff]
    %v303 = vld [vmem:[#allocation11 + $0x8] sm:$0xff]
    %v304 = vld [vmem:[#allocation11 + $0x10] sm:$0xff]
    %v305 = vld [vmem:[#allocation11 + $0x18] sm:$0xff]
    %v307 = vsel %vm105, %v302, 0
    %v310 = vsel %vm105, %v303, 0
    %v313 = vsel %vm105, %v304, 0
    %v316 = vsel %vm105, %v305, 0
    %318 = vmatprep.subr.mxu0 0.0
    %319 = vmatpush1.xpose.msra.mxu0 0.0
    %320 = vmatprep.subr.mxu0 0.0
    %321 = vmatpush1.xpose.msra.mxu0 0.0
    %322 = vmatprep.subr.mxu0 0.0
    %323 = vmatpush1.xpose.msra.mxu0 0.0
    %324 = vmatprep.subr.mxu0 0.0
    %325 = vmatpush1.xpose.msra.mxu0 0.0
    %326 = vmatprep.subr.mxu0 0.0
    %327 = vmatpush1.xpose.msra.mxu0 0.0
    %328 = vmatprep.subr.mxu0 0.0
    %329 = vmatpush1.xpose.msra.mxu0 0.0
    %330 = vmatprep.subr.mxu0 0.0
    %331 = vmatpush1.xpose.msra.mxu0 0.0
    %332 = vmatprep.subr.mxu0 0.0
    %333 = vmatpush1.xpose.msra.mxu0 0.0
    %334 = vmatprep.subr.mxu0 0.0
    %335 = vmatpush1.xpose.msra.mxu0 0.0
    %336 = vmatprep.subr.mxu0 0.0
    %337 = vmatpush1.xpose.msra.mxu0 0.0
    %338 = vmatprep.subr.mxu0 0.0
    %339 = vmatpush1.xpose.msra.mxu0 0.0
    %340 = vmatprep.subr.mxu0 0.0
    %341 = vmatpush1.xpose.msra.mxu0 0.0
    %342 = vmatprep.subr.mxu0 0.0
    %343 = vmatpush1.xpose.msra.mxu0 %v316
    %344 = vmatprep.subr.mxu0 0.0
    %345 = vmatpush1.xpose.msra.mxu0 %v313
    %346 = vmatprep.subr.mxu0 0.0
    %347 = vmatpush1.xpose.msra.mxu0 %v310
    %348 = vmatprep.subr.mxu0 0.0
    %349 = vmatpush1.xpose.msra.mxu0 %v307
    %350 = vmatprep.subr.mxu0 0.0
    %351 = vmatpush2.xpose.msra.mxu0 0.0
    %352 = vmatprep.subr.mxu0 0.0
    %353 = vmatpush2.xpose.msra.mxu0 0.0
    %354 = vmatprep.subr.mxu0 0.0
    %355 = vmatpush2.xpose.msra.mxu0 0.0
    %356 = vmatprep.subr.mxu0 0.0
    %357 = vmatpush2.xpose.msra.mxu0 0.0
    %358 = vmatprep.subr.mxu0 0.0
    %359 = vmatpush2.xpose.msra.mxu0 0.0
    %360 = vmatprep.subr.mxu0 0.0
    %361 = vmatpush2.xpose.msra.mxu0 0.0
    %362 = vmatprep.subr.mxu0 0.0
    %363 = vmatpush2.xpose.msra.mxu0 0.0
    %364 = vmatprep.subr.mxu0 0.0
    %365 = vmatpush2.xpose.msra.mxu0 0.0
    %366 = vmatprep.subr.mxu0 0.0
    %367 = vmatpush2.xpose.msra.mxu0 0.0
    %368 = vmatprep.subr.mxu0 0.0
    %369 = vmatpush2.xpose.msra.mxu0 0.0
    %370 = vmatprep.subr.mxu0 0.0
    %371 = vmatpush2.xpose.msra.mxu0 0.0
    %372 = vmatprep.subr.mxu0 0.0
    %373 = vmatpush2.xpose.msra.mxu0 0.0
    %374 = vmatprep.subr.mxu0 0.0
    %375 = vmatpush2.xpose.msra.mxu0 0.0
    %376 = vmatprep.subr.mxu0 0.0
    %377 = vmatpush2.xpose.msra.mxu0 0.0
    %378 = vmatprep.subr.mxu0 0.0
    %379 = vmatpush2.xpose.msra.mxu0 0.0
    %380 = vmatprep.subr.mxu0 0.0
    %381 = vmatpush2.xpose.msra.mxu0 0.0
    %382 = vmatprep.mubr.f32.mxu0 0.0
    %383 = vmatmul.mubr.f32.gmra.mxu0 %v107
    %v384 = vpop.f32.mrf.mxu0
    %v385 = vadd.f32 0.0, %v384
    %v386 = vpop.f32.mrf.mxu0
    %387 = vmatprep.mubr.f32.mxu0 0.0
    %388 = vmatmul.mubr.f32.gmra.mxu0 %v110
    %v389 = vpop.f32.mrf.mxu0
    %v390 = vadd.f32 0.0, %v389
    %v391 = vpop.f32.mrf.mxu0
    %392 = vdwg.mxu0
    %v393 = vadd.f32 %v300, %v385
    %v394 = vadd.f32 %v301, %v390
    %395 = vst.msk [vmem:[#allocation4] sm:$0xff] %vm105, %v393
    %396 = vst.msk [vmem:[#allocation4 + $0x8] sm:$0xff] %vm105, %v394
    // Predicated region
    $region50: #{tpu_custom_call.1} parent=1 // pred_check
      %p397 = pneg %p86
    $region51: #{tpu_custom_call.1} parent=1 // pred_check_branch
      %399 = sbr.rel (%p397) target = $region53
    $region52: #{tpu_custom_call.1} parent=1 // pred_region
      %v400 = vld [vmem:[%s4] sm:$0x1]
      %v401 = vld [vmem:[%s5] sm:$0x1]
      %v402 = vld [vmem:[%s6] sm:$0x1]
      %v403 = vld [vmem:[#allocation2] sm:$0xff]
      %v404 = vld [vmem:[#allocation2 + $0x8] sm:$0xff]
      %v406 = vlaneseq
      %v407 = vshrl.u32 %v406, 7
      %v408 = vsub.s32 0, %v407
      %v409 = vrot.slane %v400, %v408
      %v411 = vadd.f32 %v403, %v409
      %v412 = vadd.f32 %v404, %v409
      %v413 = vmul.f32 %v411, 0.35355338
      %v414 = vmul.f32 %v412, 0.35355338
      %415 = vst.msk [vmem:[#allocation13] sm:$0xff] %vm105, %v413
      %416 = vst.msk [vmem:[#allocation13 + $0x8] sm:$0xff] %vm105, %v414
      %v417 = vld [vmem:[#allocation3] sm:$0xff]
      %v418 = vld [vmem:[#allocation3 + $0x8] sm:$0xff]
      %v420 = vlaneseq
      %v421 = vshrl.u32 %v420, 7
      %v422 = vsub.s32 0, %v421
      %v423 = vrot.slane %v401, %v422
      %v425 = vadd.f32 %v417, %v423
      %v426 = vadd.f32 %v418, %v423
      %427 = vst.msk [vmem:[#allocation14] sm:$0xff] %vm105, %v425
      %428 = vst.msk [vmem:[#allocation14 + $0x8] sm:$0xff] %vm105, %v426
      %v429 = vld [vmem:[#allocation4] sm:$0xff]
      %v430 = vld [vmem:[#allocation4 + $0x8] sm:$0xff]
      %v432 = vlaneseq
      %v433 = vshrl.u32 %v432, 7
      %v434 = vsub.s32 0, %v433
      %v435 = vrot.slane %v402, %v434
      %v437 = vadd.f32 %v429, %v435
      %v438 = vadd.f32 %v430, %v435
      %439 = vst.msk [vmem:[#allocation16] sm:$0xff] %vm105, %v437
      %440 = vst.msk [vmem:[#allocation16 + $0x8] sm:$0xff] %vm105, %v438
    $region53: #{tpu_custom_call.1} parent=1 // pred_fallthru
      _
    // Predicated region
    $region54: #{tpu_custom_call.1} parent=1 // pred_check
      _
    $region55: #{tpu_custom_call.1} parent=1 // pred_check_branch
      %442 = sbr.rel (0) target = $region57
    $region56: #{tpu_custom_call.1} parent=1 // pred_region
      %s444 = ssub.s32 256, 256
      %445 = vsyncadd [#allocation7], %s444
      %s446 = sshll.u32 [#allocation13], 4
      %s447 = int_to_ptr.vmem [resolvable:$true] %s446
      %452 = dma.vmem_to_hbm [thread:$0]  %s447, 256, %s7, [#allocation7], 128, 128, 8
    $region57: #{tpu_custom_call.1} parent=1 // pred_fallthru
      _
    // Predicated region
    $region58: #{tpu_custom_call.1} parent=1 // pred_check
      _
    $region59: #{tpu_custom_call.1} parent=1 // pred_check_branch
      %454 = sbr.rel (0) target = $region61
    $region60: #{tpu_custom_call.1} parent=1 // pred_region
      %s456 = ssub.s32 256, 256
      %457 = vsyncadd [#allocation15], %s456
      %s458 = sshll.u32 [#allocation14], 4
      %s459 = int_to_ptr.vmem [resolvable:$true] %s458
      %464 = dma.vmem_to_hbm [thread:$0]  %s459, 256, %s8, [#allocation15], 128, 128, 8
    $region61: #{tpu_custom_call.1} parent=1 // pred_fallthru
      _
    // Predicated region
    $region62: #{tpu_custom_call.1} parent=1 // pred_check
      _
    $region63: #{tpu_custom_call.1} parent=1 // pred_check_branch
      %466 = sbr.rel (0) target = $region65
    $region64: #{tpu_custom_call.1} parent=1 // pred_region
      %s468 = ssub.s32 256, 256
      %469 = vsyncadd [#allocation15], %s468
      %s470 = sshll.u32 [#allocation16], 4
      %s471 = int_to_ptr.vmem [resolvable:$true] %s470
      %476 = dma.vmem_to_hbm [thread:$0]  %s471, 256, %s9, [#allocation15], 128, 128, 8
    $region65: #{tpu_custom_call.1} parent=1 // pred_fallthru
      _
    // Predicated region
    $region66: #{tpu_custom_call.1} parent=1 // pred_check
      _
    $region67: #{tpu_custom_call.1} parent=1 // pred_check_branch
      %478 = sbr.rel (0) target = $region69
    $region68: #{tpu_custom_call.1} parent=1 // pred_region
      %479 = dma.done [#allocation7], 256
    $region69: #{tpu_custom_call.1} parent=1 // pred_fallthru
      _
    // Predicated region
    $region70: #{tpu_custom_call.1} parent=1 // pred_check
      _
    $region71: #{tpu_custom_call.1} parent=1 // pred_check_branch
      %481 = sbr.rel (0) target = $region73
    $region72: #{tpu_custom_call.1} parent=1 // pred_region
      %482 = dma.done [#allocation15], 256
    $region73: #{tpu_custom_call.1} parent=1 // pred_fallthru
      _
    // Predicated region
    $region74: #{tpu_custom_call.1} parent=1 // pred_check
      _
    $region75: #{tpu_custom_call.1} parent=1 // pred_check_branch
      %484 = sbr.rel (0) target = $region77
    $region76: #{tpu_custom_call.1} parent=1 // pred_region
      %485 = dma.done [#allocation15], 256
    $region77: #{tpu_custom_call.1} parent=1 // pred_fallthru
      _
    %486 = vsyncpa [#allocation6], 1
    %487 = vsyncpa [#allocation9], 1
    %488 = vsyncpa [#allocation12], 1
    %489 = vsyncpa [#allocation7], 1
    %490 = vsyncpa [#allocation15], 1

</llo_original>
